<compile_context>
chip_gen: v7x
topology: tpu7x:2x2x1
jax: 0.10.0
libtpu: 0.0.40
codegen_flags: <defaults>
</compile_context>

<pallas_src>
import math
from functools import partial

import jax
import jax.numpy as jnp
from jax.experimental import pallas as pl
from jax.experimental.pallas import tpu as pltpu

SQRT2 = math.sqrt(2.0)
VMEM_LIMIT = 32 * 1024 * 1024  # explicit scoped-VMEM budget (safe on v5e/v6e/v7x)


# --------------------------------------------------------------------------- #
# Pallas kernels
# --------------------------------------------------------------------------- #
def _styled_dw_conv_kernel(x_ref, t_ref, w_ref, b_ref, n_ref, o_ref, acc_ref,
                           *, row_pitch, nv):
    """ModulatedDWConv2d + NoiseInjection + FusedLeakyReLU.

    One batch element, one output-channel tile.  Spatial dims are flattened
    onto the lane axis ("flat padded" layout): position q = r*row_pitch + c
    holds output pixel (r, c) for c < W; columns W, W+1 of each row are
    padding/garbage that the wrapper slices away.

    x_ref  : (1, Cin, Ntot)   zero-padded input, flattened
    t_ref  : (1, 9, Cin, 1)   depthwise 3x3 taps, style modulation folded in
    w_ref  : (1, Ct, Cin)     pointwise weights (bf16), demod folded in
    b_ref  : (1, Ct, 1)       activation bias
    n_ref  : (1, 1, Nv)       noise * noise_weight, flat padded layout
    o_ref  : (1, Ct, Nv)      output tile, flat padded layout
    acc_ref: (Cin, Nv) bf16   depthwise result, shared across Cout tiles
    """
    co = pl.program_id(1)

    @pl.when(co == 0)
    def _():
        cin = x_ref.shape[1]
        xf = x_ref[0]                                    # (Cin, Ntot)
        acc = jnp.zeros((cin, nv), jnp.float32)
        for kh in range(3):                              # depthwise 3x3 (zero pad)
            for kw in range(3):
                off = kh * row_pitch + kw
                acc = acc + t_ref[0, kh * 3 + kw] * xf[:, off:off + nv]
        acc_ref[...] = acc.astype(jnp.bfloat16)

    # pointwise 1x1 conv on the MXU (bf16 operands, f32 accumulation)
    y = jnp.dot(w_ref[0], acc_ref[...], preferred_element_type=jnp.float32)
    y = y + n_ref[0] + b_ref[0]                          # noise injection + bias
    # FusedLeakyReLU(slope=0.2, scale=sqrt(2))
    o_ref[0] = jnp.where(y >= 0.0, y, 0.2 * y) * SQRT2


def _to_rgb_skip_kernel(x_ref, e_ref, w_ref, b_ref, h_ref, f_ref):
    """hidden = x + en_feat ; freq = modulated 1x1 conv (no demod) + bias.

    x_ref/e_ref : (1, C, HW)   conv2 output / encoder feature (lane-dense flat)
    w_ref       : (1, 12, C)   bf16 weights, style modulation folded in
    b_ref       : (1, 12, 1)
    h_ref       : (1, C, HW)   fused skip output (carried to the next block)
    f_ref       : (1, 12, HW)  wavelet-domain RGB output
    """
    h = x_ref[0] + e_ref[0]
    h_ref[0] = h
    f = jnp.dot(w_ref[0], h.astype(jnp.bfloat16),
                preferred_element_type=jnp.float32)
    f_ref[0] = f + b_ref[0]


def _idwt_kernel(ll_ref, lh_ref, hl_ref, hh_ref, ee_ref, eo_ref, oe_ref, oo_ref,
                 *, apply_tanh):
    """Haar (db1, zero-mode) inverse DWT: the 4 polyphase output components.

    All refs are (1, C, H*W) lane-dense flattened blocks.
    """
    ll, lh, hl, hh = ll_ref[0], lh_ref[0], hl_ref[0], hh_ref[0]
    # TODO(synk): sign convention chosen for orthonormal Haar; verify against
    # pytorch_wavelets DWTInverse subband ordering if bit-exactness is needed.
    ee = (ll + lh + hl + hh) * 0.5      # even row, even col
    eo = (ll - lh + hl - hh) * 0.5      # even row, odd  col
    oe = (ll + lh - hl - hh) * 0.5      # odd  row, even col
    oo = (ll - lh - hl + hh) * 0.5      # odd  row, odd  col
    if apply_tanh:                      # fused out_act('tanh') for the final image
        ee, eo, oe, oo = jnp.tanh(ee), jnp.tanh(eo), jnp.tanh(oe), jnp.tanh(oo)
    ee_ref[0] = ee
    eo_ref[0] = eo
    oe_ref[0] = oe
    oo_ref[0] = oo


# --------------------------------------------------------------------------- #
# Wrappers around pallas_call
# --------------------------------------------------------------------------- #
def _equal_linear(style, w, b):
    """EqualLinear(style_dim -> C, bias_init=1): scale = 1/sqrt(fan_in)."""
    return style @ (w.T * (1.0 / math.sqrt(w.shape[1]))) + b


def styled_dw_conv(x, style, p, noise):
    """StyledConv2d with conv_module=ModulatedDWConv2d.  x: (B, Cin, H, W)."""
    B, cin, H, W = x.shape
    cout = p['wp'].shape[0]
    row_pitch = W + 2                       # padded row width
    nv = H * row_pitch                      # flat positions actually computed
    ntot = (H + 3) * row_pitch              # flat input length incl. read slack

    # style -> per-input-channel modulation
    s = _equal_linear(style, p['mod_w'], p['mod_b'])           # (B, Cin)
    wdw_s = p['wdw'] * (1.0 / 3.0)                             # (Cin, 3, 3), /sqrt(9)
    wp_s = p['wp'] * (1.0 / math.sqrt(cin))                    # (Cout, Cin)

    # demodulation, factorized: d[b,o] = rsqrt(sum_c wp^2 * s^2 * sum_k wdw^2)
    g = jnp.sum(wdw_s * wdw_s, axis=(1, 2))                    # (Cin,)
    d = jax.lax.rsqrt((s * s * g[None, :]) @ (wp_s * wp_s).T + 1e-8)  # (B, Cout)

    # fold style into the depthwise taps and demod into the pointwise weights
    taps = wdw_s.reshape(cin, 9).T                             # (9, Cin)
    taps_mod = (taps[None] * s[:, None, :])[..., None]         # (B, 9, Cin, 1) f32
    wp_mod = (wp_s[None] * d[:, :, None]).astype(jnp.bfloat16)  # (B, Cout, Cin)
    bias = p['bias'].reshape(1, cout, 1).astype(jnp.float32)
    noise_flat = jnp.pad(noise * p['noise_weight'],
                         ((0, 0), (0, 0), (0, 0), (0, 2))).reshape(1, 1, nv)

    # zero pad: 1 row/col before, 2 rows / 1 col after (extra read slack), flatten
    xpf = jnp.pad(x, ((0, 0), (0, 0), (1, 2), (1, 1))).reshape(B, cin, ntot)

    # output-channel tiling (scales to production channel counts)
    co_tile = math.gcd(cout, 128)
    if co_tile % 8 != 0:
        co_tile = cout
    n_co = cout // co_tile

    out = pl.pallas_call(
        partial(_styled_dw_conv_kernel, row_pitch=row_pitch, nv=nv),
        out_shape=jax.ShapeDtypeStruct((B, cout, nv), jnp.float32),
        grid=(B, n_co),
        in_specs=[
            pl.BlockSpec((1, cin, ntot), lambda b, co: (b, 0, 0)),
            pl.BlockSpec((1, 9, cin, 1), lambda b, co: (b, 0, 0, 0)),
            pl.BlockSpec((1, co_tile, cin), lambda b, co: (b, co, 0)),
            pl.BlockSpec((1, co_tile, 1), lambda b, co: (0, co, 0)),
            pl.BlockSpec((1, 1, nv), lambda b, co: (0, 0, 0)),
        ],
        out_specs=pl.BlockSpec((1, co_tile, nv), lambda b, co: (b, co, 0)),
        scratch_shapes=[pltpu.VMEM((cin, nv), jnp.bfloat16)],
        compiler_params=pltpu.CompilerParams(
            dimension_semantics=("parallel", "arbitrary"),
            vmem_limit_bytes=VMEM_LIMIT),
    )(xpf, taps_mod, wp_mod, bias, noise_flat)

    # drop the 2 garbage columns of each flattened row -> valid NCHW map
    return out.reshape(B, cout, H, row_pitch)[:, :, :, :W]


def to_rgb_skip(x, en_feat, style, p):
    """hidden = x + en_feat ; ToRGB(channels_in -> 12, k=1, demodulate=False)."""
    B, cin, H, W = x.shape
    hw = H * W
    s = _equal_linear(style, p['mod_w'], p['mod_b'])               # (B, Cin)
    w_mod = ((p['w'] * (1.0 / math.sqrt(cin)))[None]
             * s[:, None, :]).astype(jnp.bfloat16)                 # (B, 12, Cin)
    bias = p['bias'].reshape(1, 12, 1).astype(jnp.float32)

    xf = x.reshape(B, cin, hw)
    ef = en_feat.reshape(B, cin, hw)

    hidden, freq = pl.pallas_call(
        _to_rgb_skip_kernel,
        out_shape=[jax.ShapeDtypeStruct((B, cin, hw), jnp.float32),
                   jax.ShapeDtypeStruct((B, 12, hw), jnp.float32)],
        grid=(B,),
        in_specs=[
            pl.BlockSpec((1, cin, hw), lambda b: (b, 0, 0)),
            pl.BlockSpec((1, cin, hw), lambda b: (b, 0, 0)),
            pl.BlockSpec((1, 12, cin), lambda b: (b, 0, 0)),
            pl.BlockSpec((1, 12, 1), lambda b: (0, 0, 0)),
        ],
        out_specs=[pl.BlockSpec((1, cin, hw), lambda b: (b, 0, 0)),
                   pl.BlockSpec((1, 12, hw), lambda b: (b, 0, 0))],
        compiler_params=pltpu.CompilerParams(
            dimension_semantics=("parallel",),
            vmem_limit_bytes=VMEM_LIMIT),
    )(xf, ef, w_mod, bias)

    return hidden.reshape(B, cin, H, W), freq.reshape(B, 12, H, W)


def idwt_haar(x, apply_tanh=False):
    """DWTInverse(mode='zero', wave='db1'): (B, 4C, H, W) -> (B, C, 2H, 2W).

    Channel layout of x matches the PyTorch code:
      [LL_0..LL_{C-1}, LH_0, HL_0, HH_0, LH_1, HL_1, HH_1, ...]
    """
    B, c4, H, W = x.shape
    C = c4 // 4
    hw = H * W
    ll = x[:, :C].reshape(B, C, hw)
    high = x[:, C:].reshape(B, C, 3, hw)
    lh, hl, hh = high[:, :, 0, :], high[:, :, 1, :], high[:, :, 2, :]

    spec = pl.BlockSpec((1, C, hw), lambda b: (b, 0, 0))
    shp = jax.ShapeDtypeStruct((B, C, hw), jnp.float32)
    ee, eo, oe, oo = pl.pallas_call(
        partial(_idwt_kernel, apply_tanh=apply_tanh),
        out_shape=[shp, shp, shp, shp],
        grid=(B,),
        in_specs=[spec, spec, spec, spec],
        out_specs=[spec, spec, spec, spec],
        compiler_params=pltpu.CompilerParams(
            dimension_semantics=("parallel",),
            vmem_limit_bytes=VMEM_LIMIT),
    )(ll, lh, hl, hh)

    # polyphase interleave (pixel shuffle) — pure layout glue, done in XLA
    # TODO(synk): could be fused in-kernel with strided lane stores; kept in
    # XLA for lowering robustness.
    ee = ee.reshape(B, C, H, W)
    eo = eo.reshape(B, C, H, W)
    oe = oe.reshape(B, C, H, W)
    oo = oo.reshape(B, C, H, W)
    r_even = jnp.stack([ee, eo], axis=-1).reshape(B, C, H, 2 * W)
    r_odd = jnp.stack([oe, oo], axis=-1).reshape(B, C, H, 2 * W)
    return jnp.stack([r_even, r_odd], axis=3).reshape(B, C, 2 * H, 2 * W)


# --------------------------------------------------------------------------- #
# Module-level forward (glue orchestrating the kernels)
# --------------------------------------------------------------------------- #
BLOCK_WSIZE = 3  # styles per MobileSynthesisBlock_v4: conv1, conv2, to_img


def _style_at(style, j):
    return style if style.ndim == 2 else style[:, j, :]


def mobile_synthesis_block_v4(hidden, style, en_feat, noise_pair, p):
    """MobileSynthesisBlock_v4(channels_in, channels_out, use_spatial_att=False)."""
    hidden = idwt_haar(hidden, apply_tanh=False)                 # IDWT upsample x2
    hidden = styled_dw_conv(hidden, _style_at(style, 0), p['conv1'], noise_pair[0])
    hidden = styled_dw_conv(hidden, _style_at(style, 1), p['conv2'], noise_pair[1])
    # TODO(synk): exact encoder-feature fusion of the _v4 block is not in the
    # provided source; with use_spatial_att=False it is modelled as an additive
    # skip connection (fused into the ToRGB kernel).
    hidden, freq = to_rgb_skip(hidden, en_feat, _style_at(style, 2), p['to_img'])
    return hidden, freq


def mobile_synthesis_network_v4(style, en_feats, params, noise=None, noise_key=None):
    out = {'noise': [], 'freq': [], 'img': None, 'en_feats': en_feats}
    hidden = en_feats[0]
    key = noise_key if noise_key is not None else jax.random.PRNGKey(0)
    for i, p in enumerate(params['layers']):
        size = 2 * hidden.shape[-1]
        if noise is not None and i < len(noise) and noise[i] is not None:
            n_pair = noise[i]
        else:
            # NoiseManager(noise=None): fresh N(0,1) noise of shape (1,1,size,size) x2
            key, k1, k2 = jax.random.split(key, 3)
            n_pair = [jax.random.normal(k1, (1, 1, size, size), jnp.float32),
                      jax.random.normal(k2, (1, 1, size, size), jnp.float32)]
        out['noise'].append(n_pair)
        st = (style if style.ndim == 2
              else style[:, BLOCK_WSIZE * i + 1: BLOCK_WSIZE * i + BLOCK_WSIZE + 1, :])
        hidden, freq = mobile_synthesis_block_v4(hidden, st, en_feats[i + 1],
                                                 n_pair, p)
        out['freq'].append(freq)
    # dwt_to_img + out_act('tanh') — tanh fused into the IDWT kernel
    out['img'] = idwt_haar(out['freq'][-1], apply_tanh=True)
    return out


# --------------------------------------------------------------------------- #
# Deterministic parameter init (shapes from the module's __init__)
# --------------------------------------------------------------------------- #
def _init_styled_conv(key, cin, cout, style_dim):
    k1, k2, k3 = jax.random.split(key, 3)
    return {
        'wdw': jax.random.normal(k1, (cin, 3, 3), jnp.float32),      # depthwise 3x3
        'wp': jax.random.normal(k2, (cout, cin), jnp.float32),       # pointwise 1x1
        'mod_w': jax.random.normal(k3, (cin, style_dim), jnp.float32),
        'mod_b': jnp.ones((cin,), jnp.float32),                      # bias_init = 1
        'bias': jnp.zeros((cout,), jnp.float32),
        # PyTorch NoiseInjection inits its weight to 0; use 0.1 so the noise
        # path is numerically exercised (deterministic either way).
        'noise_weight': jnp.float32(0.1),
    }


def _init_to_rgb(key, cin, style_dim):
    k1, k2 = jax.random.split(key)
    return {
        'w': jax.random.normal(k1, (12, cin), jnp.float32),
        'mod_w': jax.random.normal(k2, (cin, style_dim), jnp.float32),
        'mod_b': jnp.ones((cin,), jnp.float32),
        'bias': jnp.zeros((12,), jnp.float32),
    }


def init_params(key, style_dim, channels):
    layers = []
    cin = channels[0]
    for cout in channels[1:]:
        key, ka, kb, kc = jax.random.split(key, 4)
        layers.append({
            'conv1': _init_styled_conv(ka, cin // 4, cout, style_dim),
            'conv2': _init_styled_conv(kb, cout, cout, style_dim),
            'to_img': _init_to_rgb(kc, cout, style_dim),
        })
        cin = cout
    return {'layers': layers}


# --------------------------------------------------------------------------- #
if __name__ == "__main__":
    key = jax.random.PRNGKey(0)
    kp, ks, kf, kn = jax.random.split(key, 4)

    style_dim = 16
    channels = [16, 8, 8]          # small stand-in for [512,512,512,512,256,128,64]
    B, H0 = 2, 8
    n_layers = len(channels) - 1

    params = init_params(kp, style_dim, channels)

    total_w = n_layers * BLOCK_WSIZE + 2       # == MobileSynthesisNetwork_v4.wsize()
    style = jax.random.normal(ks, (B, total_w, style_dim), jnp.float32)

    # encoder features: en_feats[i] has channels[i] channels at resolution H0 * 2^i
    en_feats = []
    fkeys = jax.random.split(kf, len(channels))
    h = H0
    for i, c in enumerate(channels):
        en_feats.append(jax.random.normal(fkeys[i], (B, c, h, h), jnp.float32))
        h *= 2

    out = mobile_synthesis_network_v4(style, en_feats, params, noise=None,
                                      noise_key=kn)
    img = jax.block_until_ready(out['img'])

    final_res = H0 * 2 ** (n_layers + 1)
    assert img.shape == (B, 3, final_res, final_res), img.shape
    assert all(f.shape[1] == 12 for f in out['freq'])
    assert bool(jnp.all(jnp.isfinite(img)))
    print("KERNEL_OK")
</pallas_src>

<mosaic_0001>
module attributes {stable_mosaic.version = 11 : i64} {
  func.func @_idwt_kernel(%arg0: i32, %arg1: memref<1x4x64xf32, #tpu.memory_space<vmem>>, %arg2: memref<1x4x64xf32, #tpu.memory_space<vmem>>, %arg3: memref<1x4x64xf32, #tpu.memory_space<vmem>>, %arg4: memref<1x4x64xf32, #tpu.memory_space<vmem>>, %arg5: memref<1x4x64xf32, #tpu.memory_space<vmem>>, %arg6: memref<1x4x64xf32, #tpu.memory_space<vmem>>, %arg7: memref<1x4x64xf32, #tpu.memory_space<vmem>>, %arg8: memref<1x4x64xf32, #tpu.memory_space<vmem>>) attributes {dimension_semantics = [#tpu.dimension_semantics<parallel>], iteration_bounds = array<i64: 2>, scalar_prefetch = 0 : i64, scratch_operands = 0 : i64, tpu.core_type = #tpu.core_type<tc>, window_params = [{transform_indices = @transform_0, window_bounds = array<i64: 1, 4, 64>}, {transform_indices = @transform_1, window_bounds = array<i64: 1, 4, 64>}, {transform_indices = @transform_2, window_bounds = array<i64: 1, 4, 64>}, {transform_indices = @transform_3, window_bounds = array<i64: 1, 4, 64>}, {transform_indices = @transform_4, window_bounds = array<i64: 1, 4, 64>}, {transform_indices = @transform_5, window_bounds = array<i64: 1, 4, 64>}, {transform_indices = @transform_6, window_bounds = array<i64: 1, 4, 64>}, {transform_indices = @transform_7, window_bounds = array<i64: 1, 4, 64>}]} {
    %c0 = arith.constant 0 : index
    %c0_0 = arith.constant 0 : index
    %c0_1 = arith.constant 0 : index
    %0 = vector.load %arg1[%c0, %c0_0, %c0_1] : memref<1x4x64xf32, #tpu.memory_space<vmem>>, vector<1x4x64xf32>
    %1 = vector.shape_cast %0 : vector<1x4x64xf32> to vector<4x64xf32>
    %c0_2 = arith.constant 0 : index
    %c0_3 = arith.constant 0 : index
    %c0_4 = arith.constant 0 : index
    %2 = vector.load %arg2[%c0_2, %c0_3, %c0_4] : memref<1x4x64xf32, #tpu.memory_space<vmem>>, vector<1x4x64xf32>
    %3 = vector.shape_cast %2 : vector<1x4x64xf32> to vector<4x64xf32>
    %c0_5 = arith.constant 0 : index
    %c0_6 = arith.constant 0 : index
    %c0_7 = arith.constant 0 : index
    %4 = vector.load %arg3[%c0_5, %c0_6, %c0_7] : memref<1x4x64xf32, #tpu.memory_space<vmem>>, vector<1x4x64xf32>
    %5 = vector.shape_cast %4 : vector<1x4x64xf32> to vector<4x64xf32>
    %c0_8 = arith.constant 0 : index
    %c0_9 = arith.constant 0 : index
    %c0_10 = arith.constant 0 : index
    %6 = vector.load %arg4[%c0_8, %c0_9, %c0_10] : memref<1x4x64xf32, #tpu.memory_space<vmem>>, vector<1x4x64xf32>
    %7 = vector.shape_cast %6 : vector<1x4x64xf32> to vector<4x64xf32>
    %8 = arith.addf %1, %3 : vector<4x64xf32>
    %9 = arith.addf %8, %5 : vector<4x64xf32>
    %10 = arith.addf %9, %7 : vector<4x64xf32>
    %cst = arith.constant 5.000000e-01 : f32
    %11 = vector.broadcast %cst : f32 to vector<4x64xf32>
    %12 = arith.mulf %10, %11 : vector<4x64xf32>
    %13 = arith.subf %1, %3 : vector<4x64xf32>
    %14 = arith.addf %13, %5 : vector<4x64xf32>
    %15 = arith.subf %14, %7 : vector<4x64xf32>
    %cst_11 = arith.constant 5.000000e-01 : f32
    %16 = vector.broadcast %cst_11 : f32 to vector<4x64xf32>
    %17 = arith.mulf %15, %16 : vector<4x64xf32>
    %18 = arith.addf %1, %3 : vector<4x64xf32>
    %19 = arith.subf %18, %5 : vector<4x64xf32>
    %20 = arith.subf %19, %7 : vector<4x64xf32>
    %cst_12 = arith.constant 5.000000e-01 : f32
    %21 = vector.broadcast %cst_12 : f32 to vector<4x64xf32>
    %22 = arith.mulf %20, %21 : vector<4x64xf32>
    %23 = arith.subf %1, %3 : vector<4x64xf32>
    %24 = arith.subf %23, %5 : vector<4x64xf32>
    %25 = arith.addf %24, %7 : vector<4x64xf32>
    %cst_13 = arith.constant 5.000000e-01 : f32
    %26 = vector.broadcast %cst_13 : f32 to vector<4x64xf32>
    %27 = arith.mulf %25, %26 : vector<4x64xf32>
    %c0_14 = arith.constant 0 : index
    %c0_15 = arith.constant 0 : index
    %c0_16 = arith.constant 0 : index
    %28 = vector.load %arg5[%c0_14, %c0_15, %c0_16] : memref<1x4x64xf32, #tpu.memory_space<vmem>>, vector<1x4x64xf32>
    %29 = vector.shape_cast %28 : vector<1x4x64xf32> to vector<4x64xf32>
    %30 = vector.shape_cast %12 : vector<4x64xf32> to vector<1x4x64xf32>
    tpu.vector_store %arg5[%c0_14, %c0_15, %c0_16], %30 {strides = array<i32>} : memref<1x4x64xf32, #tpu.memory_space<vmem>>, vector<1x4x64xf32>,
    %c0_17 = arith.constant 0 : index
    %c0_18 = arith.constant 0 : index
    %c0_19 = arith.constant 0 : index
    %31 = vector.load %arg6[%c0_17, %c0_18, %c0_19] : memref<1x4x64xf32, #tpu.memory_space<vmem>>, vector<1x4x64xf32>
    %32 = vector.shape_cast %31 : vector<1x4x64xf32> to vector<4x64xf32>
    %33 = vector.shape_cast %17 : vector<4x64xf32> to vector<1x4x64xf32>
    tpu.vector_store %arg6[%c0_17, %c0_18, %c0_19], %33 {strides = array<i32>} : memref<1x4x64xf32, #tpu.memory_space<vmem>>, vector<1x4x64xf32>,
    %c0_20 = arith.constant 0 : index
    %c0_21 = arith.constant 0 : index
    %c0_22 = arith.constant 0 : index
    %34 = vector.load %arg7[%c0_20, %c0_21, %c0_22] : memref<1x4x64xf32, #tpu.memory_space<vmem>>, vector<1x4x64xf32>
    %35 = vector.shape_cast %34 : vector<1x4x64xf32> to vector<4x64xf32>
    %36 = vector.shape_cast %22 : vector<4x64xf32> to vector<1x4x64xf32>
    tpu.vector_store %arg7[%c0_20, %c0_21, %c0_22], %36 {strides = array<i32>} : memref<1x4x64xf32, #tpu.memory_space<vmem>>, vector<1x4x64xf32>,
    %c0_23 = arith.constant 0 : index
    %c0_24 = arith.constant 0 : index
    %c0_25 = arith.constant 0 : index
    %37 = vector.load %arg8[%c0_23, %c0_24, %c0_25] : memref<1x4x64xf32, #tpu.memory_space<vmem>>, vector<1x4x64xf32>
    %38 = vector.shape_cast %37 : vector<1x4x64xf32> to vector<4x64xf32>
    %39 = vector.shape_cast %27 : vector<4x64xf32> to vector<1x4x64xf32>
    tpu.vector_store %arg8[%c0_23, %c0_24, %c0_25], %39 {strides = array<i32>} : memref<1x4x64xf32, #tpu.memory_space<vmem>>, vector<1x4x64xf32>,
    return
  }
  func.func @transform_0(%arg0: i32) -> (i32, i32, i32) {
    %c0_i32 = arith.constant 0 : i32
    %c0_i32_0 = arith.constant 0 : i32
    %c0_i32_1 = arith.constant 0 : i32
    return %arg0, %c0_i32, %c0_i32_0 : i32, i32, i32
  }
  func.func @transform_1(%arg0: i32) -> (i32, i32, i32) {
    %c0_i32 = arith.constant 0 : i32
    %c0_i32_0 = arith.constant 0 : i32
    %c0_i32_1 = arith.constant 0 : i32
    return %arg0, %c0_i32, %c0_i32_0 : i32, i32, i32
  }
  func.func @transform_2(%arg0: i32) -> (i32, i32, i32) {
    %c0_i32 = arith.constant 0 : i32
    %c0_i32_0 = arith.constant 0 : i32
    %c0_i32_1 = arith.constant 0 : i32
    return %arg0, %c0_i32, %c0_i32_0 : i32, i32, i32
  }
  func.func @transform_3(%arg0: i32) -> (i32, i32, i32) {
    %c0_i32 = arith.constant 0 : i32
    %c0_i32_0 = arith.constant 0 : i32
    %c0_i32_1 = arith.constant 0 : i32
    return %arg0, %c0_i32, %c0_i32_0 : i32, i32, i32
  }
  func.func @transform_4(%arg0: i32) -> (i32, i32, i32) {
    %c0_i32 = arith.constant 0 : i32
    %c0_i32_0 = arith.constant 0 : i32
    %c0_i32_1 = arith.constant 0 : i32
    return %arg0, %c0_i32, %c0_i32_0 : i32, i32, i32
  }
  func.func @transform_5(%arg0: i32) -> (i32, i32, i32) {
    %c0_i32 = arith.constant 0 : i32
    %c0_i32_0 = arith.constant 0 : i32
    %c0_i32_1 = arith.constant 0 : i32
    return %arg0, %c0_i32, %c0_i32_0 : i32, i32, i32
  }
  func.func @transform_6(%arg0: i32) -> (i32, i32, i32) {
    %c0_i32 = arith.constant 0 : i32
    %c0_i32_0 = arith.constant 0 : i32
    %c0_i32_1 = arith.constant 0 : i32
    return %arg0, %c0_i32, %c0_i32_0 : i32, i32, i32
  }
  func.func @transform_7(%arg0: i32) -> (i32, i32, i32) {
    %c0_i32 = arith.constant 0 : i32
    %c0_i32_0 = arith.constant 0 : i32
    %c0_i32_1 = arith.constant 0 : i32
    return %arg0, %c0_i32, %c0_i32_0 : i32, i32, i32
  }
}

</mosaic_0001>

<llo_original>
// kernel: tpu_custom_call.1
$region0: #{tpu_custom_call.1}
  #allocation0 [shape = 'u32[]', space=smem, size = 0x4, offset = 0x4, fixed_abs, tag = 'smem constant byte address 0x4 - core index']
  #allocation1 [shape = 'u32[144,128]{1,0:T(1,128)}', space=vmem, size = 0x12000, scoped, tag = 'internal scratch']
  %s0 = inlined_call_operand.hbm [shape: f32[2,4,64], index: 0, kind: input, shape index: {}]
  %s1 = inlined_call_operand.hbm [shape: f32[2,4,64], index: 1, kind: input, shape index: {}]
  %s2 = inlined_call_operand.hbm [shape: f32[2,4,64], index: 2, kind: input, shape index: {}]
  %s3 = inlined_call_operand.vmem [shape: f32[2,4,64], index: 3, kind: input, shape index: {}]
  %s4 = inlined_call_operand.hbm [shape: f32[2,4,64], index: 4, kind: output, shape index: {0}]
  %s5 = inlined_call_operand.hbm [shape: f32[2,4,64], index: 5, kind: output, shape index: {1}]
  %s6 = inlined_call_operand.hbm [shape: f32[2,4,64], index: 6, kind: output, shape index: {2}]
  %s7 = inlined_call_operand.hbm [shape: f32[2,4,64], index: 7, kind: output, shape index: {3}]
  %8 = xla_tuple %s4, %s5, %s6, %s7
  %s9 = sld [smem:[#allocation0]]
  $region85: #{tpu_custom_call.1} parent=0
    _
  %s11 = ssub.s32 1, %s9
  %s12 = scalar_select 0, %s11, %s9
  $region1: #{tpu_custom_call.1} parent=0
    #allocation2 [shape = 'u8[4096]{0}', space=vmem, size = 0x1000, scoped, tag = 'input window, operand 0']
    #allocation3 [shape = 's32[2]{0}', space=sflag, size = 0x8, scoped, tag = 'scoped memory for tpu_custom_call.1']
    #allocation4 [shape = 's32[2]{0}', space=sflag, size = 0x8, scoped, tag = 'scoped memory for tpu_custom_call.1']
    #allocation5 [shape = 'u8[4096]{0}', space=vmem, size = 0x1000, scoped, tag = 'input window, operand 1']
    #allocation6 [shape = 's32[2]{0}', space=sflag, size = 0x8, scoped, tag = 'scoped memory for tpu_custom_call.1']
    #allocation7 [shape = 'u8[4096]{0}', space=vmem, size = 0x1000, scoped, tag = 'input window, operand 2']
    #allocation8 [shape = 'u8[4096]{0}', space=vmem, size = 0x1000, scoped, tag = 'output window, operand 0']
    #allocation9 [shape = 'u8[4096]{0}', space=vmem, size = 0x1000, scoped, tag = 'output window, operand 1']
    #allocation10 [shape = 's32[2]{0}', space=sflag, size = 0x8, scoped, tag = 'scoped memory for tpu_custom_call.1']
    #allocation11 [shape = 'u8[4096]{0}', space=vmem, size = 0x1000, scoped, tag = 'output window, operand 2']
    #allocation12 [shape = 'u8[4096]{0}', space=vmem, size = 0x1000, scoped, tag = 'output window, operand 3']
    #allocation13 [shape = 's32[2]{0}', space=sflag, size = 0x8, scoped, tag = 'scoped memory for tpu_custom_call.1']
    %13 = vsyncpa [#allocation3], 0
    %s14 = scalar_lea.sflag [#allocation3], 1
    %15 = vsyncpa %s14, 0
    %16 = vsyncpa [#allocation6], 0
    %s17 = scalar_lea.sflag [#allocation6], 1
    %18 = vsyncpa %s17, 0
    %19 = vsyncpa [#allocation4], 0
    %s20 = scalar_lea.sflag [#allocation4], 1
    %21 = vsyncpa %s20, 0
    %22 = vsyncpa [#allocation10], 0
    %s23 = scalar_lea.sflag [#allocation10], 1
    %24 = vsyncpa %s23, 0
    %25 = vsyncpa [#allocation13], 0
    %s26 = scalar_lea.sflag [#allocation13], 1
    %27 = vsyncpa %s26, 0
    loop: start=0, step=1, limit=4
    $region2: #{tpu_custom_call.1} parent=1 // loop_pre_header
      _
    $region3: #{tpu_custom_call.1} parent=1 // loop_header
      %s29 = sphi 0, %s33
      %p30 = scmp.ge.s32.totalorder %s29, 4
      %s39 = sphi 0, %s41
      %s42 = sphi 0, %s39
      %s43 = sphi 0, %s42
      %s59 = sphi 0, %s43
      %s65 = sphi 0, %s67
      %s68 = sphi 0, %s65
      %s69 = sphi 0, %s68
      %s85 = sphi 0, %s69
      %s91 = sphi 0, %s93
      %s94 = sphi 0, %s91
      %s95 = sphi 0, %s94
      %s111 = sphi 0, %s95
      %s117 = sphi 0, %s119
      %s120 = sphi 0, %s117
      %s121 = sphi 0, %s120
      %s137 = sphi 0, %s121
      %s143 = sphi 0, %s145
      %s146 = sphi 0, %s143
      %s147 = sphi 0, %s146
      %s163 = sphi 0, %s147
      %s169 = sphi 0, %s171
      %s172 = sphi 0, %s169
      %s173 = sphi 0, %s172
      %s189 = sphi 0, %s173
      %s195 = sphi 0, %s197
      %s198 = sphi 0, %s195
      %s199 = sphi 0, %s198
      %s215 = sphi 0, %s199
      %s221 = sphi 0, %s223
      %s224 = sphi 0, %s221
      %s225 = sphi 0, %s224
      %s241 = sphi 0, %s225
    $region4: #{tpu_custom_call.1} parent=1 // loop_header_branch
      %32 = sbr.rel (%p30) target = $region8
    $region5: #{tpu_custom_call.1} parent=1 // loop_body
      %s34 = ssub.s32 %s29, 1
      %s35 = ssub.s32 %s29, 2
      %s36 = sadd.s32 %s29, 1
      %s37 = ssub.s32 %s29, %s36
      %p38 = scmp.eq.s32.totalorder %s37, 0
      %s40 = sadd.s32 %s39, 1
      %s41 = scalar_select %p38, %s39, %s40
      %p44 = pneg %p38
      %p45 = scmp.eq.s32.totalorder %s29, 1
      %p46 = por %p44, %p45
      %p47 = scmp.ne.s32.totalorder %s39, %s42
      %p48 = scmp.eq.s32.totalorder %s29, 0
      %p49 = por %p47, %p48
      %p50 = scmp.ne.s32.totalorder %s39, %s42
      %p51 = scmp.eq.s32.totalorder %s34, 1
      %p52 = por %p50, %p51
      %p53 = scmp.ne.s32.totalorder %s42, %s43
      %p54 = scmp.eq.s32.totalorder %s34, 0
      %p55 = por %p53, %p54
      %p56 = scmp.ne.s32.totalorder %s42, %s43
      %p57 = scmp.eq.s32.totalorder %s35, 1
      %p58 = por %p56, %p57
      %p60 = scmp.ne.s32.totalorder %s43, %s59
      %p61 = scmp.eq.s32.totalorder %s35, 0
      %p62 = por %p60, %p61
      %s63 = ssub.s32 %s29, %s36
      %p64 = scmp.eq.s32.totalorder %s63, 0
      %s66 = sadd.s32 %s65, 1
      %s67 = scalar_select %p64, %s65, %s66
      %p70 = pneg %p64
      %p71 = scmp.eq.s32.totalorder %s29, 1
      %p72 = por %p70, %p71
      %p73 = scmp.ne.s32.totalorder %s65, %s68
      %p74 = scmp.eq.s32.totalorder %s29, 0
      %p75 = por %p73, %p74
      %p76 = scmp.ne.s32.totalorder %s65, %s68
      %p77 = scmp.eq.s32.totalorder %s34, 1
      %p78 = por %p76, %p77
      %p79 = scmp.ne.s32.totalorder %s68, %s69
      %p80 = scmp.eq.s32.totalorder %s34, 0
      %p81 = por %p79, %p80
      %p82 = scmp.ne.s32.totalorder %s68, %s69
      %p83 = scmp.eq.s32.totalorder %s35, 1
      %p84 = por %p82, %p83
      %p86 = scmp.ne.s32.totalorder %s69, %s85
      %p87 = scmp.eq.s32.totalorder %s35, 0
      %p88 = por %p86, %p87
      %s89 = ssub.s32 %s29, %s36
      %p90 = scmp.eq.s32.totalorder %s89, 0
      %s92 = sadd.s32 %s91, 1
      %s93 = scalar_select %p90, %s91, %s92
      %p96 = pneg %p90
      %p97 = scmp.eq.s32.totalorder %s29, 1
      %p98 = por %p96, %p97
      %p99 = scmp.ne.s32.totalorder %s91, %s94
      %p100 = scmp.eq.s32.totalorder %s29, 0
      %p101 = por %p99, %p100
      %p102 = scmp.ne.s32.totalorder %s91, %s94
      %p103 = scmp.eq.s32.totalorder %s34, 1
      %p104 = por %p102, %p103
      %p105 = scmp.ne.s32.totalorder %s94, %s95
      %p106 = scmp.eq.s32.totalorder %s34, 0
      %p107 = por %p105, %p106
      %p108 = scmp.ne.s32.totalorder %s94, %s95
      %p109 = scmp.eq.s32.totalorder %s35, 1
      %p110 = por %p108, %p109
      %p112 = scmp.ne.s32.totalorder %s95, %s111
      %p113 = scmp.eq.s32.totalorder %s35, 0
      %p114 = por %p112, %p113
      %s115 = ssub.s32 %s29, %s36
      %p116 = scmp.eq.s32.totalorder %s115, 0
      %s118 = sadd.s32 %s117, 1
      %s119 = scalar_select %p116, %s117, %s118
      %p122 = pneg %p116
      %p123 = scmp.eq.s32.totalorder %s29, 1
      %p124 = por %p122, %p123
      %p125 = scmp.ne.s32.totalorder %s117, %s120
      %p126 = scmp.eq.s32.totalorder %s29, 0
      %p127 = por %p125, %p126
      %p128 = scmp.ne.s32.totalorder %s117, %s120
      %p129 = scmp.eq.s32.totalorder %s34, 1
      %p130 = por %p128, %p129
      %p131 = scmp.ne.s32.totalorder %s120, %s121
      %p132 = scmp.eq.s32.totalorder %s34, 0
      %p133 = por %p131, %p132
      %p134 = scmp.ne.s32.totalorder %s120, %s121
      %p135 = scmp.eq.s32.totalorder %s35, 1
      %p136 = por %p134, %p135
      %p138 = scmp.ne.s32.totalorder %s121, %s137
      %p139 = scmp.eq.s32.totalorder %s35, 0
      %p140 = por %p138, %p139
      %s141 = ssub.s32 %s29, %s36
      %p142 = scmp.eq.s32.totalorder %s141, 0
      %s144 = sadd.s32 %s143, 1
      %s145 = scalar_select %p142, %s143, %s144
      %p148 = pneg %p142
      %p149 = scmp.eq.s32.totalorder %s29, 1
      %p150 = por %p148, %p149
      %p151 = scmp.ne.s32.totalorder %s143, %s146
      %p152 = scmp.eq.s32.totalorder %s29, 0
      %p153 = por %p151, %p152
      %p154 = scmp.ne.s32.totalorder %s143, %s146
      %p155 = scmp.eq.s32.totalorder %s34, 1
      %p156 = por %p154, %p155
      %p157 = scmp.ne.s32.totalorder %s146, %s147
      %p158 = scmp.eq.s32.totalorder %s34, 0
      %p159 = por %p157, %p158
      %p160 = scmp.ne.s32.totalorder %s146, %s147
      %p161 = scmp.eq.s32.totalorder %s35, 1
      %p162 = por %p160, %p161
      %p164 = scmp.ne.s32.totalorder %s147, %s163
      %p165 = scmp.eq.s32.totalorder %s35, 0
      %p166 = por %p164, %p165
      %s167 = ssub.s32 %s29, %s36
      %p168 = scmp.eq.s32.totalorder %s167, 0
      %s170 = sadd.s32 %s169, 1
      %s171 = scalar_select %p168, %s169, %s170
      %p174 = pneg %p168
      %p175 = scmp.eq.s32.totalorder %s29, 1
      %p176 = por %p174, %p175
      %p177 = scmp.ne.s32.totalorder %s169, %s172
      %p178 = scmp.eq.s32.totalorder %s29, 0
      %p179 = por %p177, %p178
      %p180 = scmp.ne.s32.totalorder %s169, %s172
      %p181 = scmp.eq.s32.totalorder %s34, 1
      %p182 = por %p180, %p181
      %p183 = scmp.ne.s32.totalorder %s172, %s173
      %p184 = scmp.eq.s32.totalorder %s34, 0
      %p185 = por %p183, %p184
      %p186 = scmp.ne.s32.totalorder %s172, %s173
      %p187 = scmp.eq.s32.totalorder %s35, 1
      %p188 = por %p186, %p187
      %p190 = scmp.ne.s32.totalorder %s173, %s189
      %p191 = scmp.eq.s32.totalorder %s35, 0
      %p192 = por %p190, %p191
      %s193 = ssub.s32 %s29, %s36
      %p194 = scmp.eq.s32.totalorder %s193, 0
      %s196 = sadd.s32 %s195, 1
      %s197 = scalar_select %p194, %s195, %s196
      %p200 = pneg %p194
      %p201 = scmp.eq.s32.totalorder %s29, 1
      %p202 = por %p200, %p201
      %p203 = scmp.ne.s32.totalorder %s195, %s198
      %p204 = scmp.eq.s32.totalorder %s29, 0
      %p205 = por %p203, %p204
      %p206 = scmp.ne.s32.totalorder %s195, %s198
      %p207 = scmp.eq.s32.totalorder %s34, 1
      %p208 = por %p206, %p207
      %p209 = scmp.ne.s32.totalorder %s198, %s199
      %p210 = scmp.eq.s32.totalorder %s34, 0
      %p211 = por %p209, %p210
      %p212 = scmp.ne.s32.totalorder %s198, %s199
      %p213 = scmp.eq.s32.totalorder %s35, 1
      %p214 = por %p212, %p213
      %p216 = scmp.ne.s32.totalorder %s199, %s215
      %p217 = scmp.eq.s32.totalorder %s35, 0
      %p218 = por %p216, %p217
      %s219 = ssub.s32 %s29, %s36
      %p220 = scmp.eq.s32.totalorder %s219, 0
      %s222 = sadd.s32 %s221, 1
      %s223 = scalar_select %p220, %s221, %s222
      %p226 = pneg %p220
      %p227 = scmp.eq.s32.totalorder %s29, 1
      %p228 = por %p226, %p227
      %p229 = scmp.ne.s32.totalorder %s221, %s224
      %p230 = scmp.eq.s32.totalorder %s29, 0
      %p231 = por %p229, %p230
      %p232 = scmp.ne.s32.totalorder %s221, %s224
      %p233 = scmp.eq.s32.totalorder %s34, 1
      %p234 = por %p232, %p233
      %p235 = scmp.ne.s32.totalorder %s224, %s225
      %p236 = scmp.eq.s32.totalorder %s34, 0
      %p237 = por %p235, %p236
      %p238 = scmp.ne.s32.totalorder %s224, %s225
      %p239 = scmp.eq.s32.totalorder %s35, 1
      %p240 = por %p238, %p239
      %p242 = scmp.ne.s32.totalorder %s225, %s241
      %p243 = scmp.eq.s32.totalorder %s35, 0
      %p244 = por %p242, %p243
      %p245 = scmp.le.s32.totalorder 1, %s29
      %p246 = scmp.lt.s32.totalorder %s29, 3
      %p247 = pnand %p245, %p246
      %p248 = pneg %p247
      // Predicated region
      $region9: #{tpu_custom_call.1} parent=5 // pred_check
        _
      $region10: #{tpu_custom_call.1} parent=5 // pred_check_branch
        %250 = sbr.rel (%p247) target = $region12
      $region11: #{tpu_custom_call.1} parent=5 // pred_region
        %s251 = ssub.s32 %s29, 1
      $region12: #{tpu_custom_call.1} parent=5 // pred_fallthru
        _
      %p252 = scmp.lt.s32.totalorder %s29, 2
      // Predicated region
      $region13: #{tpu_custom_call.1} parent=5 // pred_check
        %p253 = pneg %p252
      $region14: #{tpu_custom_call.1} parent=5 // pred_check_branch
        %255 = sbr.rel (%p253) target = $region16
      $region15: #{tpu_custom_call.1} parent=5 // pred_region
        // Predicated region
        $region17: #{tpu_custom_call.1} parent=15 // pred_check
          %p256 = pneg %p49
        $region18: #{tpu_custom_call.1} parent=15 // pred_check_branch
          %258 = sbr.rel (%p256) target = $region20
        $region19: #{tpu_custom_call.1} parent=15 // pred_region
          %s259 = sand.u32 %s39, 1
          %s260 = scalar_lea.sflag [#allocation3], %s259
          %s261 = sand.u32 %s39, 1
          %s262 = smul.addr %s261, 4
          %s263 = scalar_lea.vmem [#allocation2], %s262
          %s265 = ssub.s32 64, 64
          %266 = vsyncadd %s260, %s265
          %s267 = smul.addr %s29, 64
          %s268 = scalar_lea.hbm %s0, %s267
          %s270 = sshll.u32 %s263, 4
          %s271 = int_to_ptr.vmem [resolvable:$true] %s270
          %273 = dma.hbm_to_vmem [thread:$0]  %s268, 64, %s271, %s260
        $region20: #{tpu_custom_call.1} parent=15 // pred_fallthru
          _
        // Predicated region
        $region21: #{tpu_custom_call.1} parent=15 // pred_check
          %p274 = pneg %p75
        $region22: #{tpu_custom_call.1} parent=15 // pred_check_branch
          %276 = sbr.rel (%p274) target = $region24
        $region23: #{tpu_custom_call.1} parent=15 // pred_region
          %s277 = sand.u32 %s29, 1
          %s278 = scalar_lea.sflag [#allocation6], %s277
          %s279 = sand.u32 %s65, 1
          %s280 = smul.addr %s279, 4
          %s281 = scalar_lea.vmem [#allocation5], %s280
          %s283 = ssub.s32 64, 64
          %284 = vsyncadd %s278, %s283
          %s285 = smul.addr %s29, 64
          %s286 = scalar_lea.hbm %s1, %s285
          %s288 = sshll.u32 %s281, 4
          %s289 = int_to_ptr.vmem [resolvable:$true] %s288
          %291 = dma.hbm_to_vmem [thread:$0]  %s286, 64, %s289, %s278
        $region24: #{tpu_custom_call.1} parent=15 // pred_fallthru
          _
        // Predicated region
        $region25: #{tpu_custom_call.1} parent=15 // pred_check
          %p292 = pneg %p101
        $region26: #{tpu_custom_call.1} parent=15 // pred_check_branch
          %294 = sbr.rel (%p292) target = $region28
        $region27: #{tpu_custom_call.1} parent=15 // pred_region
          %s295 = sand.u32 %s29, 1
          %s296 = scalar_lea.sflag [#allocation6], %s295
          %s297 = sand.u32 %s91, 1
          %s298 = smul.addr %s297, 4
          %s299 = scalar_lea.vmem [#allocation7], %s298
          %s301 = ssub.s32 64, 64
          %302 = vsyncadd %s296, %s301
          %s303 = smul.addr %s29, 64
          %s304 = scalar_lea.hbm %s2, %s303
          %s306 = sshll.u32 %s299, 4
          %s307 = int_to_ptr.vmem [resolvable:$true] %s306
          %309 = dma.hbm_to_vmem [thread:$0]  %s304, 64, %s307, %s296
        $region28: #{tpu_custom_call.1} parent=15 // pred_fallthru
          _
        // Predicated region
        $region29: #{tpu_custom_call.1} parent=15 // pred_check
          %p310 = pneg %p127
        $region30: #{tpu_custom_call.1} parent=15 // pred_check_branch
          %312 = sbr.rel (%p310) target = $region32
        $region31: #{tpu_custom_call.1} parent=15 // pred_region
          %p313 = scmp.lt.s32.totalorder %s29, 1
          %s314 = scalar_select %p313, %s29, 1
          %s315 = smul.addr %s314, 4
          %s316 = scalar_lea.vmem %s3, %s315
        $region32: #{tpu_custom_call.1} parent=15 // pred_fallthru
          _
      $region16: #{tpu_custom_call.1} parent=5 // pred_fallthru
        _
      %p317 = scmp.le.s32.totalorder 1, %s29
      %p318 = scmp.lt.s32.totalorder %s29, 3
      %p319 = pnand %p317, %p318
      %p320 = pneg %p319
      // Predicated region
      $region33: #{tpu_custom_call.1} parent=5 // pred_check
        _
      $region34: #{tpu_custom_call.1} parent=5 // pred_check_branch
        %322 = sbr.rel (%p319) target = $region36
      $region35: #{tpu_custom_call.1} parent=5 // pred_region
        %s323 = ssub.s32 %s29, 1
        %s324 = sand.u32 %s42, 1
        %s325 = scalar_lea.sflag [#allocation3], %s324
        %s326 = sand.u32 %s42, 1
        %s327 = smul.addr %s326, 4
        %s328 = scalar_lea.vmem [#allocation2], %s327
        // Predicated region
        $region37: #{tpu_custom_call.1} parent=35 // pred_check
          %p329 = pneg %p55
        $region38: #{tpu_custom_call.1} parent=35 // pred_check_branch
          %331 = sbr.rel (%p329) target = $region40
        $region39: #{tpu_custom_call.1} parent=35 // pred_region
          %332 = dma.done %s325, 64
        $region40: #{tpu_custom_call.1} parent=35 // pred_fallthru
          _
        %s333 = sand.u32 %s34, 1
        %s334 = scalar_lea.sflag [#allocation6], %s333
        %s335 = sand.u32 %s68, 1
        %s336 = smul.addr %s335, 4
        %s337 = scalar_lea.vmem [#allocation5], %s336
        // Predicated region
        $region41: #{tpu_custom_call.1} parent=35 // pred_check
          %p338 = pneg %p81
        $region42: #{tpu_custom_call.1} parent=35 // pred_check_branch
          %340 = sbr.rel (%p338) target = $region44
        $region43: #{tpu_custom_call.1} parent=35 // pred_region
          %341 = dma.done %s334, 64
        $region44: #{tpu_custom_call.1} parent=35 // pred_fallthru
          _
        %s342 = sand.u32 %s34, 1
        %s343 = scalar_lea.sflag [#allocation6], %s342
        %s344 = sand.u32 %s94, 1
        %s345 = smul.addr %s344, 4
        %s346 = scalar_lea.vmem [#allocation7], %s345
        // Predicated region
        $region45: #{tpu_custom_call.1} parent=35 // pred_check
          %p347 = pneg %p107
        $region46: #{tpu_custom_call.1} parent=35 // pred_check_branch
          %349 = sbr.rel (%p347) target = $region48
        $region47: #{tpu_custom_call.1} parent=35 // pred_region
          %350 = dma.done %s343, 64
        $region48: #{tpu_custom_call.1} parent=35 // pred_fallthru
          _
        %s351 = sand.u32 %s42, 1
        %s352 = scalar_lea.sflag [#allocation3], %s351
        %s353 = sand.u32 %s42, 1
        %s354 = smul.addr %s353, 4
        %s355 = scalar_lea.vmem [#allocation2], %s354
        %p356 = pneg %p55
        %p357 = pneg %p52
        %s358 = sand.u32 %s34, 1
        %s359 = scalar_lea.sflag [#allocation6], %s358
        %s360 = sand.u32 %s68, 1
        %s361 = smul.addr %s360, 4
        %s362 = scalar_lea.vmem [#allocation5], %s361
        %p363 = pneg %p81
        %p364 = pneg %p78
        %s365 = sand.u32 %s34, 1
        %s366 = scalar_lea.sflag [#allocation6], %s365
        %s367 = sand.u32 %s94, 1
        %s368 = smul.addr %s367, 4
        %s369 = scalar_lea.vmem [#allocation7], %s368
        %p370 = pneg %p107
        %p371 = pneg %p104
        %p372 = scmp.lt.s32.totalorder %s34, 1
        %s373 = scalar_select %p372, %s34, 1
        %s374 = smul.addr %s373, 4
        %s375 = scalar_lea.vmem %s3, %s374
        %p376 = pneg %p133
        %p377 = pneg %p130
        %p378 = pneg %p159
        %p379 = pneg %p156
        %s380 = sand.u32 %s146, 1
        %s381 = scalar_lea.sflag [#allocation4], %s380
        %s382 = sand.u32 %s146, 1
        %s383 = smul.addr %s382, 4
        %s384 = scalar_lea.vmem [#allocation8], %s383
        %p385 = pneg %p185
        %p386 = pneg %p182
        %s387 = sand.u32 %s34, 1
        %s388 = scalar_lea.sflag [#allocation10], %s387
        %s389 = sand.u32 %s172, 1
        %s390 = smul.addr %s389, 4
        %s391 = scalar_lea.vmem [#allocation9], %s390
        %p392 = pneg %p211
        %p393 = pneg %p208
        %s394 = sand.u32 %s34, 1
        %s395 = scalar_lea.sflag [#allocation10], %s394
        %s396 = sand.u32 %s198, 1
        %s397 = smul.addr %s396, 4
        %s398 = scalar_lea.vmem [#allocation11], %s397
        %p399 = pneg %p237
        %p400 = pneg %p234
        %s401 = sand.u32 %s224, 1
        %s402 = scalar_lea.sflag [#allocation13], %s401
        %s403 = sand.u32 %s224, 1
        %s404 = smul.addr %s403, 4
        %s405 = scalar_lea.vmem [#allocation12], %s404
        %p406 = scmp.lt.s32.totalorder %s34, 1
        %s407 = scalar_select %p406, %s34, 1
        %s408 = smul.addr %s407, 4
        %s409 = scalar_lea.vmem %s3, %s408
        %v410 = vld [vmem:[%s328] sm:$0xf]
        %v411 = vld [vmem:[%s337] sm:$0xf]
        %v412 = vld [vmem:[%s346] sm:$0xf]
        %v413 = vld [vmem:[%s409] sm:$0xf]
        %v414 = vadd.f32 %v410, %v411
        %v415 = vadd.f32 %v414, %v412
        %v416 = vadd.f32 %v415, %v413
        %v417 = vmul.f32 %v416, 0.5
        %v418 = vsub.f32 %v410, %v411
        %v419 = vadd.f32 %v418, %v412
        %v420 = vsub.f32 %v419, %v413
        %v421 = vmul.f32 %v420, 0.5
        %v422 = vsub.f32 %v414, %v412
        %v423 = vsub.f32 %v422, %v413
        %v424 = vmul.f32 %v423, 0.5
        %v425 = vsub.f32 %v418, %v412
        %v426 = vadd.f32 %v425, %v413
        %v427 = vmul.f32 %v426, 0.5
        %vm428 = vcmask 519168
        %429 = vst.msk [vmem:[%s384] sm:$0xf] %vm428, %v417
        %430 = vst.msk [vmem:[%s391] sm:$0xf] %vm428, %v421
        %431 = vst.msk [vmem:[%s398] sm:$0xf] %vm428, %v424
        %432 = vst.msk [vmem:[%s405] sm:$0xf] %vm428, %v427
        %s433 = sand.u32 %s146, 1
        %s434 = scalar_lea.sflag [#allocation4], %s433
        %s435 = sand.u32 %s146, 1
        %s436 = smul.addr %s435, 4
        %s437 = scalar_lea.vmem [#allocation8], %s436
        %s438 = sand.u32 %s34, 1
        %s439 = scalar_lea.sflag [#allocation10], %s438
        %s440 = sand.u32 %s172, 1
        %s441 = smul.addr %s440, 4
        %s442 = scalar_lea.vmem [#allocation9], %s441
        %s443 = sand.u32 %s34, 1
        %s444 = scalar_lea.sflag [#allocation10], %s443
        %s445 = sand.u32 %s198, 1
        %s446 = smul.addr %s445, 4
        %s447 = scalar_lea.vmem [#allocation11], %s446
        %s448 = sand.u32 %s224, 1
        %s449 = scalar_lea.sflag [#allocation13], %s448
        %s450 = sand.u32 %s224, 1
        %s451 = smul.addr %s450, 4
        %s452 = scalar_lea.vmem [#allocation12], %s451
        // Predicated region
        $region49: #{tpu_custom_call.1} parent=35 // pred_check
          %p453 = pneg %p156
        $region50: #{tpu_custom_call.1} parent=35 // pred_check_branch
          %455 = sbr.rel (%p453) target = $region52
        $region51: #{tpu_custom_call.1} parent=35 // pred_region
          %s457 = ssub.s32 64, 64
          %458 = vsyncadd %s434, %s457
          %s459 = smul.addr %s34, 64
          %s460 = scalar_lea.hbm %s4, %s459
          %s462 = sshll.u32 %s437, 4
          %s463 = int_to_ptr.vmem [resolvable:$true] %s462
          %465 = dma.vmem_to_hbm [thread:$0]  %s463, 64, %s460, %s434
        $region52: #{tpu_custom_call.1} parent=35 // pred_fallthru
          _
        // Predicated region
        $region53: #{tpu_custom_call.1} parent=35 // pred_check
          %p466 = pneg %p182
        $region54: #{tpu_custom_call.1} parent=35 // pred_check_branch
          %468 = sbr.rel (%p466) target = $region56
        $region55: #{tpu_custom_call.1} parent=35 // pred_region
          %s470 = ssub.s32 64, 64
          %471 = vsyncadd %s439, %s470
          %s472 = smul.addr %s34, 64
          %s473 = scalar_lea.hbm %s5, %s472
          %s475 = sshll.u32 %s442, 4
          %s476 = int_to_ptr.vmem [resolvable:$true] %s475
          %478 = dma.vmem_to_hbm [thread:$0]  %s476, 64, %s473, %s439
        $region56: #{tpu_custom_call.1} parent=35 // pred_fallthru
          _
        // Predicated region
        $region57: #{tpu_custom_call.1} parent=35 // pred_check
          %p479 = pneg %p208
        $region58: #{tpu_custom_call.1} parent=35 // pred_check_branch
          %481 = sbr.rel (%p479) target = $region60
        $region59: #{tpu_custom_call.1} parent=35 // pred_region
          %s483 = ssub.s32 64, 64
          %484 = vsyncadd %s444, %s483
          %s485 = smul.addr %s34, 64
          %s486 = scalar_lea.hbm %s6, %s485
          %s488 = sshll.u32 %s447, 4
          %s489 = int_to_ptr.vmem [resolvable:$true] %s488
          %491 = dma.vmem_to_hbm [thread:$0]  %s489, 64, %s486, %s444
        $region60: #{tpu_custom_call.1} parent=35 // pred_fallthru
          _
        // Predicated region
        $region61: #{tpu_custom_call.1} parent=35 // pred_check
          %p492 = pneg %p234
        $region62: #{tpu_custom_call.1} parent=35 // pred_check_branch
          %494 = sbr.rel (%p492) target = $region64
        $region63: #{tpu_custom_call.1} parent=35 // pred_region
          %s496 = ssub.s32 64, 64
          %497 = vsyncadd %s449, %s496
          %s498 = smul.addr %s34, 64
          %s499 = scalar_lea.hbm %s7, %s498
          %s501 = sshll.u32 %s452, 4
          %s502 = int_to_ptr.vmem [resolvable:$true] %s501
          %504 = dma.vmem_to_hbm [thread:$0]  %s502, 64, %s499, %s449
        $region64: #{tpu_custom_call.1} parent=35 // pred_fallthru
          _
      $region36: #{tpu_custom_call.1} parent=5 // pred_fallthru
        _
      %p505 = scmp.le.s32.totalorder 2, %s29
      // Predicated region
      $region65: #{tpu_custom_call.1} parent=5 // pred_check
        %p506 = pneg %p505
      $region66: #{tpu_custom_call.1} parent=5 // pred_check_branch
        %508 = sbr.rel (%p506) target = $region68
      $region67: #{tpu_custom_call.1} parent=5 // pred_region
        %s509 = ssub.s32 %s29, 2
        // Predicated region
        $region69: #{tpu_custom_call.1} parent=67 // pred_check
          %p510 = pneg %p162
        $region70: #{tpu_custom_call.1} parent=67 // pred_check_branch
          %512 = sbr.rel (%p510) target = $region72
        $region71: #{tpu_custom_call.1} parent=67 // pred_region
          %s513 = sand.u32 %s147, 1
          %s514 = scalar_lea.sflag [#allocation4], %s513
          %s515 = sand.u32 %s147, 1
          %s516 = smul.addr %s515, 4
          %s517 = scalar_lea.vmem [#allocation8], %s516
          %518 = dma.done %s514, 64
        $region72: #{tpu_custom_call.1} parent=67 // pred_fallthru
          _
        // Predicated region
        $region73: #{tpu_custom_call.1} parent=67 // pred_check
          %p519 = pneg %p188
        $region74: #{tpu_custom_call.1} parent=67 // pred_check_branch
          %521 = sbr.rel (%p519) target = $region76
        $region75: #{tpu_custom_call.1} parent=67 // pred_region
          %s522 = sand.u32 %s35, 1
          %s523 = scalar_lea.sflag [#allocation10], %s522
          %s524 = sand.u32 %s173, 1
          %s525 = smul.addr %s524, 4
          %s526 = scalar_lea.vmem [#allocation9], %s525
          %527 = dma.done %s523, 64
        $region76: #{tpu_custom_call.1} parent=67 // pred_fallthru
          _
        // Predicated region
        $region77: #{tpu_custom_call.1} parent=67 // pred_check
          %p528 = pneg %p214
        $region78: #{tpu_custom_call.1} parent=67 // pred_check_branch
          %530 = sbr.rel (%p528) target = $region80
        $region79: #{tpu_custom_call.1} parent=67 // pred_region
          %s531 = sand.u32 %s35, 1
          %s532 = scalar_lea.sflag [#allocation10], %s531
          %s533 = sand.u32 %s199, 1
          %s534 = smul.addr %s533, 4
          %s535 = scalar_lea.vmem [#allocation11], %s534
          %536 = dma.done %s532, 64
        $region80: #{tpu_custom_call.1} parent=67 // pred_fallthru
          _
        // Predicated region
        $region81: #{tpu_custom_call.1} parent=67 // pred_check
          %p537 = pneg %p240
        $region82: #{tpu_custom_call.1} parent=67 // pred_check_branch
          %539 = sbr.rel (%p537) target = $region84
        $region83: #{tpu_custom_call.1} parent=67 // pred_region
          %s540 = sand.u32 %s225, 1
          %s541 = scalar_lea.sflag [#allocation13], %s540
          %s542 = sand.u32 %s225, 1
          %s543 = smul.addr %s542, 4
          %s544 = scalar_lea.vmem [#allocation12], %s543
          %545 = dma.done %s541, 64
        $region84: #{tpu_custom_call.1} parent=67 // pred_fallthru
          _
      $region68: #{tpu_custom_call.1} parent=5 // pred_fallthru
        _
    $region6: #{tpu_custom_call.1} parent=1 // loop_footer
      %s33 = sadd.s32 1, %s29
    $region7: #{tpu_custom_call.1} parent=1 // loop_footer_branch
      %28 = sbr.rel target = $region3
    $region8: #{tpu_custom_call.1} parent=1 // loop_exit
      _
    %546 = vsyncpa [#allocation3], 1
    %s547 = scalar_lea.sflag [#allocation3], 1
    %548 = vsyncpa %s547, 1
    %549 = vsyncpa [#allocation6], 1
    %s550 = scalar_lea.sflag [#allocation6], 1
    %551 = vsyncpa %s550, 1
    %552 = vsyncpa [#allocation4], 1
    %s553 = scalar_lea.sflag [#allocation4], 1
    %554 = vsyncpa %s553, 1
    %555 = vsyncpa [#allocation10], 1
    %s556 = scalar_lea.sflag [#allocation10], 1
    %557 = vsyncpa %s556, 1
    %558 = vsyncpa [#allocation13], 1
    %s559 = scalar_lea.sflag [#allocation13], 1
    %560 = vsyncpa %s559, 1

</llo_original>
